<compile_context>
chip_gen: v5e
topology: v5e:2x2
jax: 0.10.0
libtpu: 0.0.40
codegen_flags: <defaults>
</compile_context>

<pallas_src>
import functools

import jax
import jax.numpy as jnp
from jax.experimental import pallas as pl
from jax.experimental.pallas import tpu as pltpu

_TC_MAX = 2048
_F32_MIN = float(jnp.finfo(jnp.float32).min)   # finite "-inf" sentinel (NaN-proof)


def _round_up(x, m):
    return ((x + m - 1) // m) * m


def _vmem_budgets():
    """(logits double-buffer budget, scoped vmem limit) sized per TPU generation."""
    try:
        cap = int(pltpu.get_tpu_info().vmem_capacity_bytes)
    except Exception:
        cap = 64 * 1024 * 1024                     # conservative if query unavailable
    if cap >= 96 * 1024 * 1024:                    # v5e / v6e: 128 MiB physical VMEM
        return 48 * 1024 * 1024, 64 * 1024 * 1024
    # v7x: 64 MiB physical VMEM — leave headroom for Mosaic's f32 temporaries.
    return 24 * 1024 * 1024, 48 * 1024 * 1024


def _pick_tc(C):
    """Class-tile width; prefer a lane-aligned divisor of C so no ragged mask compiles."""
    if C < 128:
        return C                                   # single sub-vreg chunk, whole row
    if C <= _TC_MAX and C % 128 == 0:
        return C                                   # whole row of classes in one block
    # Largest multiple of 128 dividing C (kept >= 1024 so per-step DMA stays large).
    for cand in range(_TC_MAX, 1023, -128):
        if C % cand == 0:
            return cand
    # No clean divisor: ragged last class block, masked in-kernel (tail chunks only).
    return min(_TC_MAX, (C // 128) * 128)


def _ce_kernel(logits_ref, tgt_ref, out_ref, m_ref, l_ref, t_ref, *,
               n_rows, n_cols, tm, tc, lane_w):
    """Streaming (online log-sum-exp) cross entropy with per-lane accumulators.

    m/l/t scratch are (tm, lane_w): per class block only elementwise VALU/EUP work
    runs; the XLU lane reductions run exactly once, in the finalize step.
    """
    i = pl.program_id(0)                  # row-block index   ("parallel")
    j = pl.program_id(1)                  # class-block index ("arbitrary", innermost)

    n_chunks = tc // lane_w
    ragged_cols = (n_cols % tc) != 0
    r = n_cols % tc                       # valid columns in the last class block

    @pl.when(j == 0)
    def _():
        m_ref[...] = jnp.full_like(m_ref, _F32_MIN)   # per-lane running max
        l_ref[...] = jnp.zeros_like(l_ref)            # per-lane running exp-sum
        t_ref[...] = jnp.zeros_like(t_ref)            # per-lane target-logit pickup

    lane_iota = jax.lax.broadcasted_iota(jnp.int32, (tm, lane_w), 1)   # constant
    mask_min = float(jnp.finfo(logits_ref.dtype).min)

    def chunk_needs_mask(k):
        # Compile-time: can this lane chunk overlap the padded tail of the last block?
        return ragged_cols and (k * lane_w + lane_w > r)

    def valid_lanes(k):
        # Dynamic: global column  j*tc + k*lane_w + lane  <  n_cols
        return lane_iota < (n_cols - j * tc - k * lane_w)

    def chunk(k):
        return logits_ref[:, k * lane_w:(k + 1) * lane_w]

    # ---- pass 1: per-lane block max (elementwise, native dtype — bf16 stays on VPU) ----
    blk_max = None
    for k in range(n_chunks):
        c = chunk(k)
        if chunk_needs_mask(k):
            c = jnp.where(valid_lanes(k), c, mask_min)
        blk_max = c if blk_max is None else jnp.maximum(blk_max, c)
    blk_max = blk_max.astype(jnp.float32)

    m_prev = m_ref[...]
    m_new = jnp.maximum(m_prev, blk_max)
    l_acc = l_ref[...] * jnp.exp(m_prev - m_new)      # rescale once per class block
    m_ref[...] = m_new

    # ---- pass 2: exp-sum + target-logit pickup (f32 accumulation) ----
    tgt_b = jnp.broadcast_to(tgt_ref[...] - j * tc, (tm, lane_w))   # hoisted broadcast
    t_acc = t_ref[...]
    for k in range(n_chunks):
        c32 = chunk(k).astype(jnp.float32)
        e = jnp.exp(c32 - m_new)
        if chunk_needs_mask(k):
            e = jnp.where(valid_lanes(k), e, 0.0)
        l_acc = l_acc + e
        shifted_iota = lane_iota if k == 0 else lane_iota + k * lane_w
        t_acc = jnp.where(shifted_iota == tgt_b, c32, t_acc)   # at most one hit per row
    l_ref[...] = l_acc
    t_ref[...] = t_acc

    @pl.when(j == pl.num_programs(1) - 1)
    def _():
        m_lanes = m_ref[...]
        m_row = jnp.max(m_lanes, axis=-1, keepdims=True)                        # XLU, once
        l_row = jnp.sum(l_ref[...] * jnp.exp(m_lanes - m_row), axis=-1, keepdims=True)
        t_row = jnp.sum(t_ref[...], axis=-1, keepdims=True)
        loss = (m_row + jnp.log(l_row)) - t_row                                 # (tm, 1) NLL
        if n_rows % tm != 0:
            row = i * tm + jax.lax.broadcasted_iota(jnp.int32, (tm, 1), 0)
            loss = jnp.where(row < n_rows, loss, 0.0)
        # Lane-dense per-row-block partial sum; no cross-block serialization.
        out_ref[...] = jnp.full((1, 8, 128), jnp.sum(loss), dtype=jnp.float32)


def cross_entropy_loss(logits, targets, *, tm=None, tc=None,
                       boundary_dtype=None, vmem_limit_bytes=None):
    """logits: (N, C) float (f32/bf16); targets: (N,) int -> scalar mean CE loss."""
    if boundary_dtype is not None:
        # e.g. jnp.bfloat16: halves HBM logits traffic (dominant lever on v5e);
        # in-kernel accumulation stays f32.
        logits = logits.astype(boundary_dtype)

    N, C = logits.shape
    itemsize = jnp.dtype(logits.dtype).itemsize

    logits_budget, default_limit = _vmem_budgets()
    if vmem_limit_bytes is None:
        vmem_limit_bytes = default_limit

    if tc is None:
        tc = _pick_tc(C)
    lane_w = tc if tc < 128 else 128
    assert tc % lane_w == 0, f"tc={tc} must be a multiple of 128 (or equal C when C<128)"

    if tm is None:
        rows = logits_budget // (2 * tc * itemsize)      # double-buffered logits tile
        tm = min(1024, rows)
    tm = min(tm, _round_up(N, 8))
    # Megacore (v7x): make sure the "parallel" row axis has >= 2 blocks to shard.
    tm = min(tm, _round_up(pl.cdiv(N, 2), 8))
    tm = max(8, (tm // 8) * 8)

    num_row_blocks = pl.cdiv(N, tm)
    num_col_blocks = pl.cdiv(C, tc)
    targets2d = targets.reshape(N, 1).astype(jnp.int32)

    partials = pl.pallas_call(
        functools.partial(_ce_kernel, n_rows=N, n_cols=C, tm=tm, tc=tc, lane_w=lane_w),
        out_shape=jax.ShapeDtypeStruct((num_row_blocks, 8, 128), jnp.float32),
        grid_spec=pltpu.PrefetchScalarGridSpec(
            num_scalar_prefetch=0,
            grid=(num_row_blocks, num_col_blocks),
            in_specs=[
                pl.BlockSpec((tm, tc), lambda i, j: (i, j)),
                pl.BlockSpec((tm, 1), lambda i, j: (i, 0)),
            ],
            out_specs=pl.BlockSpec((1, 8, 128), lambda i, j: (i, 0, 0)),
            scratch_shapes=[
                pltpu.VMEM((tm, lane_w), jnp.float32),   # per-lane running max
                pltpu.VMEM((tm, lane_w), jnp.float32),   # per-lane running exp-sum
                pltpu.VMEM((tm, lane_w), jnp.float32),   # per-lane target logit
            ],
        ),
        compiler_params=pltpu.CompilerParams(
            dimension_semantics=("parallel", "arbitrary"),
            vmem_limit_bytes=vmem_limit_bytes,
        ),
    )(logits, targets2d)

    # Tiny epilogue reduction in plain JAX (keeps the grid's row axis 'parallel').
    return jnp.sum(partials[:, 0, 0]) / jnp.float32(N)


if __name__ == "__main__":
    key = jax.random.PRNGKey(0)
    ks = jax.random.split(key, 8)

    def ref_ce(lg, tg):
        logp = jax.nn.log_softmax(lg.astype(jnp.float32), axis=-1)
        return -jnp.mean(logp[jnp.arange(lg.shape[0]), tg])

    # 1) Small classifier-style shapes (C < 128: single class block, single chunk).
    N, C = 16, 32
    logits = jax.random.normal(ks[0], (N, C), dtype=jnp.float32)
    targets = jax.random.randint(ks[1], (N,), 0, C, dtype=jnp.int32)
    loss = jax.block_until_ready(cross_entropy_loss(logits, targets))
    ref = ref_ce(logits, targets)
    assert jnp.allclose(loss, ref, atol=1e-5, rtol=1e-5), (loss, ref)

    # 2) Streaming-LSE path: 2 row blocks x 2 class blocks, bf16 logits at the boundary.
    N2, C2 = 16, 256
    logits2 = jax.random.normal(ks[2], (N2, C2), dtype=jnp.float32).astype(jnp.bfloat16)
    targets2 = jax.random.randint(ks[3], (N2,), 0, C2, dtype=jnp.int32)
    loss2 = jax.block_until_ready(cross_entropy_loss(logits2, targets2, tm=8, tc=128))
    ref2 = ref_ce(logits2, targets2)
    assert jnp.allclose(loss2, ref2, atol=1e-4, rtol=1e-4), (loss2, ref2)

    # 3) Ragged rows (N % tm != 0) + multi-chunk class block (C multiple of 128).
    N3, C3 = 20, 384
    logits3 = jax.random.normal(ks[4], (N3, C3), dtype=jnp.float32)
    targets3 = jax.random.randint(ks[5], (N3,), 0, C3, dtype=jnp.int32)
    loss3 = jax.block_until_ready(cross_entropy_loss(logits3, targets3))
    ref3 = ref_ce(logits3, targets3)
    assert jnp.allclose(loss3, ref3, atol=1e-5, rtol=1e-5), (loss3, ref3)

    # 4) Ragged class tail (C not a multiple of 128): masked tail chunks of last block.
    N4, C4 = 16, 200
    logits4 = jax.random.normal(ks[6], (N4, C4), dtype=jnp.float32)
    targets4 = jax.random.randint(ks[7], (N4,), 0, C4, dtype=jnp.int32)
    loss4 = jax.block_until_ready(cross_entropy_loss(logits4, targets4))
    ref4 = ref_ce(logits4, targets4)
    assert jnp.allclose(loss4, ref4, atol=1e-5, rtol=1e-5), (loss4, ref4)

    print("KERNEL_OK")
</pallas_src>

<mosaic_0001>
module attributes {stable_mosaic.version = 11 : i64} {
  func.func @_ce_kernel(%arg0: i32, %arg1: i32, %arg2: memref<8x32xf32, #tpu.memory_space<vmem>>, %arg3: memref<8x1xi32, #tpu.memory_space<vmem>>, %arg4: memref<1x8x128xf32, #tpu.memory_space<vmem>>, %arg5: memref<8x32xf32, #tpu.memory_space<vmem>>, %arg6: memref<8x32xf32, #tpu.memory_space<vmem>>, %arg7: memref<8x32xf32, #tpu.memory_space<vmem>>) attributes {dimension_semantics = [#tpu.dimension_semantics<parallel>, #tpu.dimension_semantics<arbitrary>], iteration_bounds = array<i64: 2, 1>, scalar_prefetch = 0 : i64, scratch_operands = 3 : i64, tpu.core_type = #tpu.core_type<tc>, window_params = [{transform_indices = @transform_0, window_bounds = array<i64: 8, 32>}, {transform_indices = @transform_1, window_bounds = array<i64: 8, 1>}, {transform_indices = @transform_2, window_bounds = array<i64: 1, 8, 128>}]} {
    %c0_i32 = arith.constant 0 : i32
    %0 = arith.cmpi eq, %arg1, %c0_i32 : i32
    %1 = arith.extui %0 : i1 to i32
    %c0_i32_0 = arith.constant 0 : i32
    %2 = arith.cmpi ne, %1, %c0_i32_0 : i32
    scf.if %2 {
      %cst = arith.constant -3.40282347E+38 : f32
      %30 = vector.broadcast %cst : f32 to vector<8x32xf32>
      %c0_20 = arith.constant 0 : index
      %c0_21 = arith.constant 0 : index
      %31 = vector.load %arg5[%c0_20, %c0_21] : memref<8x32xf32, #tpu.memory_space<vmem>>, vector<8x32xf32>
      tpu.vector_store %arg5[%c0_20, %c0_21], %30 {strides = array<i32>} : memref<8x32xf32, #tpu.memory_space<vmem>>, vector<8x32xf32>,
      %cst_22 = arith.constant 0.000000e+00 : f32
      %32 = vector.broadcast %cst_22 : f32 to vector<8x32xf32>
      %c0_23 = arith.constant 0 : index
      %c0_24 = arith.constant 0 : index
      %33 = vector.load %arg6[%c0_23, %c0_24] : memref<8x32xf32, #tpu.memory_space<vmem>>, vector<8x32xf32>
      tpu.vector_store %arg6[%c0_23, %c0_24], %32 {strides = array<i32>} : memref<8x32xf32, #tpu.memory_space<vmem>>, vector<8x32xf32>,
      %cst_25 = arith.constant 0.000000e+00 : f32
      %34 = vector.broadcast %cst_25 : f32 to vector<8x32xf32>
      %c0_26 = arith.constant 0 : index
      %c0_27 = arith.constant 0 : index
      %35 = vector.load %arg7[%c0_26, %c0_27] : memref<8x32xf32, #tpu.memory_space<vmem>>, vector<8x32xf32>
      tpu.vector_store %arg7[%c0_26, %c0_27], %34 {strides = array<i32>} : memref<8x32xf32, #tpu.memory_space<vmem>>, vector<8x32xf32>,
    } else {
    }
    %3 = tpu.iota {dimensions = array<i32: 1>} : vector<8x32xi32>
    %c0 = arith.constant 0 : index
    %c0_1 = arith.constant 0 : index
    %4 = vector.load %arg2[%c0, %c0_1] : memref<8x32xf32, #tpu.memory_space<vmem>>, vector<8x32xf32>
    %c0_2 = arith.constant 0 : index
    %c0_3 = arith.constant 0 : index
    %5 = vector.load %arg5[%c0_2, %c0_3] : memref<8x32xf32, #tpu.memory_space<vmem>>, vector<8x32xf32>
    %6 = arith.maximumf %5, %4 : vector<8x32xf32>
    %c0_4 = arith.constant 0 : index
    %c0_5 = arith.constant 0 : index
    %7 = vector.load %arg6[%c0_4, %c0_5] : memref<8x32xf32, #tpu.memory_space<vmem>>, vector<8x32xf32>
    %8 = arith.subf %5, %6 : vector<8x32xf32>
    %9 = math.exp %8 : vector<8x32xf32>
    %10 = arith.mulf %7, %9 : vector<8x32xf32>
    %c0_6 = arith.constant 0 : index
    %c0_7 = arith.constant 0 : index
    %11 = vector.load %arg5[%c0_6, %c0_7] : memref<8x32xf32, #tpu.memory_space<vmem>>, vector<8x32xf32>
    tpu.vector_store %arg5[%c0_6, %c0_7], %6 {strides = array<i32>} : memref<8x32xf32, #tpu.memory_space<vmem>>, vector<8x32xf32>,
    %c0_8 = arith.constant 0 : index
    %c0_9 = arith.constant 0 : index
    %12 = vector.load %arg3[%c0_8, %c0_9] : memref<8x1xi32, #tpu.memory_space<vmem>>, vector<8x1xi32>
    %c32_i32 = arith.constant 32 : i32
    %13 = arith.muli %arg1, %c32_i32 : i32
    %14 = vector.broadcast %13 : i32 to vector<8x1xi32>
    %15 = arith.subi %12, %14 : vector<8x1xi32>
    %16 = vector.shape_cast %15 : vector<8x1xi32> to vector<8x1xi32>
    %17 = vector.broadcast %16 : vector<8x1xi32> to vector<8x32xi32>
    %c0_10 = arith.constant 0 : index
    %c0_11 = arith.constant 0 : index
    %18 = vector.load %arg7[%c0_10, %c0_11] : memref<8x32xf32, #tpu.memory_space<vmem>>, vector<8x32xf32>
    %c0_12 = arith.constant 0 : index
    %c0_13 = arith.constant 0 : index
    %19 = vector.load %arg2[%c0_12, %c0_13] : memref<8x32xf32, #tpu.memory_space<vmem>>, vector<8x32xf32>
    %20 = arith.subf %19, %6 : vector<8x32xf32>
    %21 = math.exp %20 : vector<8x32xf32>
    %22 = arith.addf %10, %21 : vector<8x32xf32>
    %23 = arith.cmpi eq, %3, %17 : vector<8x32xi32>
    %24 = arith.select %23, %19, %18 : vector<8x32xi1>, vector<8x32xf32>
    %c0_14 = arith.constant 0 : index
    %c0_15 = arith.constant 0 : index
    %25 = vector.load %arg6[%c0_14, %c0_15] : memref<8x32xf32, #tpu.memory_space<vmem>>, vector<8x32xf32>
    tpu.vector_store %arg6[%c0_14, %c0_15], %22 {strides = array<i32>} : memref<8x32xf32, #tpu.memory_space<vmem>>, vector<8x32xf32>,
    %c0_16 = arith.constant 0 : index
    %c0_17 = arith.constant 0 : index
    %26 = vector.load %arg7[%c0_16, %c0_17] : memref<8x32xf32, #tpu.memory_space<vmem>>, vector<8x32xf32>
    tpu.vector_store %arg7[%c0_16, %c0_17], %24 {strides = array<i32>} : memref<8x32xf32, #tpu.memory_space<vmem>>, vector<8x32xf32>,
    %c0_i32_18 = arith.constant 0 : i32
    %27 = arith.cmpi eq, %arg1, %c0_i32_18 : i32
    %28 = arith.extui %27 : i1 to i32
    %c0_i32_19 = arith.constant 0 : i32
    %29 = arith.cmpi ne, %28, %c0_i32_19 : i32
    scf.if %29 {
      %c0_20 = arith.constant 0 : index
      %c0_21 = arith.constant 0 : index
      %30 = vector.load %arg5[%c0_20, %c0_21] : memref<8x32xf32, #tpu.memory_space<vmem>>, vector<8x32xf32>
      %cst = arith.constant dense<0xFF800000> : vector<8xf32>
      %31 = vector.multi_reduction <maximumf>, %30, %cst [1] : vector<8x32xf32> to vector<8xf32>
      %32 = vector.shape_cast %31 : vector<8xf32> to vector<8x1xf32>
      %c0_22 = arith.constant 0 : index
      %c0_23 = arith.constant 0 : index
      %33 = vector.load %arg6[%c0_22, %c0_23] : memref<8x32xf32, #tpu.memory_space<vmem>>, vector<8x32xf32>
      %34 = vector.broadcast %32 : vector<8x1xf32> to vector<8x32xf32>
      %35 = arith.subf %30, %34 : vector<8x32xf32>
      %36 = math.exp %35 : vector<8x32xf32>
      %37 = arith.mulf %33, %36 : vector<8x32xf32>
      %cst_24 = arith.constant dense<0.000000e+00> : vector<8xf32>
      %38 = vector.multi_reduction <add>, %37, %cst_24 [1] : vector<8x32xf32> to vector<8xf32>
      %39 = vector.shape_cast %38 : vector<8xf32> to vector<8x1xf32>
      %c0_25 = arith.constant 0 : index
      %c0_26 = arith.constant 0 : index
      %40 = vector.load %arg7[%c0_25, %c0_26] : memref<8x32xf32, #tpu.memory_space<vmem>>, vector<8x32xf32>
      %cst_27 = arith.constant dense<0.000000e+00> : vector<8xf32>
      %41 = vector.multi_reduction <add>, %40, %cst_27 [1] : vector<8x32xf32> to vector<8xf32>
      %42 = vector.shape_cast %41 : vector<8xf32> to vector<8x1xf32>
      %43 = math.log %39 : vector<8x1xf32>
      %44 = arith.addf %32, %43 : vector<8x1xf32>
      %45 = arith.subf %44, %42 : vector<8x1xf32>
      %46 = vector.shape_cast %45 : vector<8x1xf32> to vector<1x8x1xf32>
      %cst_28 = arith.constant dense<0.000000e+00> : vector<1xf32>
      %47 = vector.multi_reduction <add>, %46, %cst_28 [1, 2] : vector<1x8x1xf32> to vector<1xf32>
      %48 = vector.shape_cast %47 : vector<1xf32> to vector<1x1x1xf32>
      %49 = vector.extract %48[0, 0, 0] : f32 from vector<1x1x1xf32>
      %50 = vector.broadcast %49 : f32 to vector<1x8x128xf32>
      %c0_29 = arith.constant 0 : index
      %c0_30 = arith.constant 0 : index
      %c0_31 = arith.constant 0 : index
      %51 = vector.load %arg4[%c0_29, %c0_30, %c0_31] : memref<1x8x128xf32, #tpu.memory_space<vmem>>, vector<1x8x128xf32>
      tpu.vector_store %arg4[%c0_29, %c0_30, %c0_31], %50 {strides = array<i32>} : memref<1x8x128xf32, #tpu.memory_space<vmem>>, vector<1x8x128xf32>,
    } else {
    }
    return
  }
  func.func @transform_0(%arg0: i32, %arg1: i32) -> (i32, i32) {
    %c0_i32 = arith.constant 0 : i32
    return %arg0, %arg1 : i32, i32
  }
  func.func @transform_1(%arg0: i32, %arg1: i32) -> (i32, i32) {
    %c0_i32 = arith.constant 0 : i32
    %c0_i32_0 = arith.constant 0 : i32
    return %arg0, %c0_i32 : i32, i32
  }
  func.func @transform_2(%arg0: i32, %arg1: i32) -> (i32, i32, i32) {
    %c0_i32 = arith.constant 0 : i32
    %c0_i32_0 = arith.constant 0 : i32
    %c0_i32_1 = arith.constant 0 : i32
    return %arg0, %c0_i32, %c0_i32_0 : i32, i32, i32
  }
}

</mosaic_0001>

<llo_original>
// kernel: tpu_custom_call.1
$region0: #{tpu_custom_call.1}
  #allocation0 [shape = 'u32[]', space=smem, size = 0x4, offset = 0x4, fixed_abs, tag = 'smem constant byte address 0x4 - core index']
  #allocation1 [shape = 'u32[72,128]{1,0:T(1,128)}', space=vmem, size = 0x9000, scoped, tag = 'internal scratch']
  #allocation2 [shape = 'f32[8,32]{1,0:T(8,128)}', space=vmem, size = 0x1000, scoped, tag = 'scratch operand']
  #allocation3 [shape = 'f32[8,32]{1,0:T(8,128)}', space=vmem, size = 0x1000, scoped, tag = 'scratch operand']
  #allocation4 [shape = 'f32[8,32]{1,0:T(8,128)}', space=vmem, size = 0x1000, scoped, tag = 'scratch operand']
  %s0 = inlined_call_operand.vmem [shape: f32[16,32], index: 0, kind: input, shape index: {}]
  %s1 = inlined_call_operand.vmem [shape: s32[16,1], index: 1, kind: input, shape index: {}]
  %s2 = inlined_call_operand.hbm [shape: f32[2,8,128], index: 2, kind: output, shape index: {}]
  %s3 = sld [smem:[#allocation0]]
  $region49: #{tpu_custom_call.1} parent=0
    _
  %s5 = ssub.s32 1, %s3
  %s6 = scalar_select 0, %s5, %s3
  $region1: #{tpu_custom_call.1} parent=0
    #allocation5 [shape = 'u8[8192]{0}', space=vmem, size = 0x2000, scoped, tag = 'output window, operand 0']
    #allocation6 [shape = 's32[2]{0}', space=sflag, size = 0x8, scoped, tag = 'scoped memory for tpu_custom_call.1']
    %7 = vsyncpa [#allocation6], 0
    %s8 = scalar_lea.sflag [#allocation6], 1
    %9 = vsyncpa %s8, 0
    loop: start=0, step=1, limit=4
    $region2: #{tpu_custom_call.1} parent=1 // loop_pre_header
      _
    $region3: #{tpu_custom_call.1} parent=1 // loop_header
      %s11 = sphi 0, %s15
      %p12 = scmp.ge.s32.totalorder %s11, 4
      %s18 = sphi 0, %s30
      %s19 = sphi 0, %s26
      %s20 = sphi 0, %s18
      %s21 = sphi 0, %s19
      %s22 = sphi 0, %s20
      %s23 = sphi 0, %s21
      %s35 = sphi 0, %s37
      %s38 = sphi 0, %s35
      %s39 = sphi 0, %s38
      %s55 = sphi 0, %s39
      %s61 = sphi 0, %s63
      %s64 = sphi 0, %s61
      %s65 = sphi 0, %s64
      %s81 = sphi 0, %s65
      %s87 = sphi 0, %s89
      %s90 = sphi 0, %s87
      %s91 = sphi 0, %s90
      %s107 = sphi 0, %s91
    $region4: #{tpu_custom_call.1} parent=1 // loop_header_branch
      %14 = sbr.rel (%p12) target = $region8
    $region5: #{tpu_custom_call.1} parent=1 // loop_body
      %s16 = ssub.s32 %s11, 1
      %s17 = ssub.s32 %s11, 2
      %s24 = sadd.s32 1, %s19
      %p25 = scmp.ge.s32.totalorder %s24, 1
      %s26 = scalar_select %p25, 0, %s24
      %s27 = sadd.s32 1, %s18
      %s28 = scalar_select %p25, %s27, %s18
      %p29 = scmp.ge.s32.totalorder %s28, 2
      %s30 = scalar_select %p29, 0, %s28
      %s31 = ssub.s32 %s18, %s30
      %s32 = ssub.s32 %s19, %s26
      %s33 = sor.u32 %s31, %s32
      %p34 = scmp.eq.s32.totalorder %s33, 0
      %s36 = sadd.s32 %s35, 1
      %s37 = scalar_select %p34, %s35, %s36
      %p40 = pneg %p34
      %p41 = scmp.eq.s32.totalorder %s11, 1
      %p42 = por %p40, %p41
      %p43 = scmp.ne.s32.totalorder %s35, %s38
      %p44 = scmp.eq.s32.totalorder %s11, 0
      %p45 = por %p43, %p44
      %p46 = scmp.ne.s32.totalorder %s35, %s38
      %p47 = scmp.eq.s32.totalorder %s16, 1
      %p48 = por %p46, %p47
      %p49 = scmp.ne.s32.totalorder %s38, %s39
      %p50 = scmp.eq.s32.totalorder %s16, 0
      %p51 = por %p49, %p50
      %p52 = scmp.ne.s32.totalorder %s38, %s39
      %p53 = scmp.eq.s32.totalorder %s17, 1
      %p54 = por %p52, %p53
      %p56 = scmp.ne.s32.totalorder %s39, %s55
      %p57 = scmp.eq.s32.totalorder %s17, 0
      %p58 = por %p56, %p57
      %s59 = ssub.s32 %s18, %s30
      %p60 = scmp.eq.s32.totalorder %s59, 0
      %s62 = sadd.s32 %s61, 1
      %s63 = scalar_select %p60, %s61, %s62
      %p66 = pneg %p60
      %p67 = scmp.eq.s32.totalorder %s11, 1
      %p68 = por %p66, %p67
      %p69 = scmp.ne.s32.totalorder %s61, %s64
      %p70 = scmp.eq.s32.totalorder %s11, 0
      %p71 = por %p69, %p70
      %p72 = scmp.ne.s32.totalorder %s61, %s64
      %p73 = scmp.eq.s32.totalorder %s16, 1
      %p74 = por %p72, %p73
      %p75 = scmp.ne.s32.totalorder %s64, %s65
      %p76 = scmp.eq.s32.totalorder %s16, 0
      %p77 = por %p75, %p76
      %p78 = scmp.ne.s32.totalorder %s64, %s65
      %p79 = scmp.eq.s32.totalorder %s17, 1
      %p80 = por %p78, %p79
      %p82 = scmp.ne.s32.totalorder %s65, %s81
      %p83 = scmp.eq.s32.totalorder %s17, 0
      %p84 = por %p82, %p83
      %s85 = ssub.s32 %s18, %s30
      %p86 = scmp.eq.s32.totalorder %s85, 0
      %s88 = sadd.s32 %s87, 1
      %s89 = scalar_select %p86, %s87, %s88
      %p92 = pneg %p86
      %p93 = scmp.eq.s32.totalorder %s11, 1
      %p94 = por %p92, %p93
      %p95 = scmp.ne.s32.totalorder %s87, %s90
      %p96 = scmp.eq.s32.totalorder %s11, 0
      %p97 = por %p95, %p96
      %p98 = scmp.ne.s32.totalorder %s87, %s90
      %p99 = scmp.eq.s32.totalorder %s16, 1
      %p100 = por %p98, %p99
      %p101 = scmp.ne.s32.totalorder %s90, %s91
      %p102 = scmp.eq.s32.totalorder %s16, 0
      %p103 = por %p101, %p102
      %p104 = scmp.ne.s32.totalorder %s90, %s91
      %p105 = scmp.eq.s32.totalorder %s17, 1
      %p106 = por %p104, %p105
      %p108 = scmp.ne.s32.totalorder %s91, %s107
      %p109 = scmp.eq.s32.totalorder %s17, 0
      %p110 = por %p108, %p109
      %p111 = scmp.le.s32.totalorder 1, %s11
      %p112 = scmp.lt.s32.totalorder %s11, 3
      %p113 = pnand %p111, %p112
      %p114 = pneg %p113
      // Predicated region
      $region9: #{tpu_custom_call.1} parent=5 // pred_check
        _
      $region10: #{tpu_custom_call.1} parent=5 // pred_check_branch
        %116 = sbr.rel (%p113) target = $region12
      $region11: #{tpu_custom_call.1} parent=5 // pred_region
        %s117 = ssub.s32 %s11, 1
      $region12: #{tpu_custom_call.1} parent=5 // pred_fallthru
        _
      %p118 = scmp.lt.s32.totalorder %s11, 2
      // Predicated region
      $region13: #{tpu_custom_call.1} parent=5 // pred_check
        %p119 = pneg %p118
      $region14: #{tpu_custom_call.1} parent=5 // pred_check_branch
        %121 = sbr.rel (%p119) target = $region16
      $region15: #{tpu_custom_call.1} parent=5 // pred_region
        // Predicated region
        $region17: #{tpu_custom_call.1} parent=15 // pred_check
          %p122 = pneg %p45
        $region18: #{tpu_custom_call.1} parent=15 // pred_check_branch
          %124 = sbr.rel (%p122) target = $region20
        $region19: #{tpu_custom_call.1} parent=15 // pred_region
          %p125 = scmp.lt.s32.totalorder %s18, 1
          %s126 = scalar_select %p125, %s18, 1
          %p127 = scmp.lt.s32.totalorder %s19, 0
          %s128 = scalar_select %p127, %s19, 0
          %s129 = sadd.s32 %s128, %s126
          %s130 = smul.addr %s129, 8
          %s131 = scalar_lea.vmem %s0, %s130
        $region20: #{tpu_custom_call.1} parent=15 // pred_fallthru
          _
        // Predicated region
        $region21: #{tpu_custom_call.1} parent=15 // pred_check
          %p132 = pneg %p71
        $region22: #{tpu_custom_call.1} parent=15 // pred_check_branch
          %134 = sbr.rel (%p132) target = $region24
        $region23: #{tpu_custom_call.1} parent=15 // pred_region
          %p135 = scmp.lt.s32.totalorder %s18, 1
          %s136 = scalar_select %p135, %s18, 1
          %s137 = smul.addr %s136, 8
          %s138 = scalar_lea.vmem %s1, %s137
        $region24: #{tpu_custom_call.1} parent=15 // pred_fallthru
          _
      $region16: #{tpu_custom_call.1} parent=5 // pred_fallthru
        _
      %p139 = scmp.le.s32.totalorder 1, %s11
      %p140 = scmp.lt.s32.totalorder %s11, 3
      %p141 = pnand %p139, %p140
      %p142 = pneg %p141
      // Predicated region
      $region25: #{tpu_custom_call.1} parent=5 // pred_check
        _
      $region26: #{tpu_custom_call.1} parent=5 // pred_check_branch
        %144 = sbr.rel (%p141) target = $region28
      $region27: #{tpu_custom_call.1} parent=5 // pred_region
        %s145 = ssub.s32 %s11, 1
        %p146 = scmp.lt.s32.totalorder %s20, 1
        %s147 = scalar_select %p146, %s20, 1
        %p148 = scmp.lt.s32.totalorder %s21, 0
        %s149 = scalar_select %p148, %s21, 0
        %s150 = sadd.s32 %s149, %s147
        %s151 = smul.addr %s150, 8
        %s152 = scalar_lea.vmem %s0, %s151
        %p153 = pneg %p51
        %p154 = pneg %p48
        %p155 = scmp.lt.s32.totalorder %s20, 1
        %s156 = scalar_select %p155, %s20, 1
        %s157 = smul.addr %s156, 8
        %s158 = scalar_lea.vmem %s1, %s157
        %p159 = pneg %p77
        %p160 = pneg %p74
        %p161 = pneg %p103
        %p162 = pneg %p100
        %s163 = sand.u32 %s90, 1
        %s164 = scalar_lea.sflag [#allocation6], %s163
        %s165 = sand.u32 %s90, 1
        %s166 = smul.addr %s165, 8
        %s167 = scalar_lea.vmem [#allocation5], %s166
        %p168 = scmp.lt.s32.totalorder %s20, 1
        %s169 = scalar_select %p168, %s20, 1
        %p170 = scmp.lt.s32.totalorder %s21, 0
        %s171 = scalar_select %p170, %s21, 0
        %s172 = sadd.s32 %s171, %s169
        %s173 = smul.addr %s172, 8
        %s174 = scalar_lea.vmem %s0, %s173
        %p175 = scmp.lt.s32.totalorder %s20, 1
        %s176 = scalar_select %p175, %s20, 1
        %s177 = smul.addr %s176, 8
        %s178 = scalar_lea.vmem %s1, %s177
        %p179 = scmp.eq.s32.totalorder %s21, 0
        // Predicated region
        $region29: #{tpu_custom_call.1} parent=27 // pred_check
          %p180 = pneg %p179
        $region30: #{tpu_custom_call.1} parent=27 // pred_check_branch
          %182 = sbr.rel (%p180) target = $region32
        $region31: #{tpu_custom_call.1} parent=27 // pred_region
          %vm183 = vcmask 261120
          %184 = vst.msk [vmem:[#allocation2] sm:$0xff] %vm183, -3.4028235e+38
          %185 = vst.msk [vmem:[#allocation3] sm:$0xff] %vm183, 0.0
          %186 = vst.msk [vmem:[#allocation4] sm:$0xff] %vm183, 0.0
        $region32: #{tpu_custom_call.1} parent=27 // pred_fallthru
          _
        %v187 = vlaneseq
        %v188 = vand.u32 %v187, 127
        %v189 = vld [vmem:[%s174] sm:$0xff]
        %v190 = vld [vmem:[#allocation2] sm:$0xff]
        %v191 = vmax.f32 %v190, %v189
        %v192 = vld [vmem:[#allocation3] sm:$0xff]
        %v193 = vsub.f32 %v190, %v191
        %v194 = vmul.f32 %v193, 1.442695
        %v195 = vpow.pop %v194
        %v196 = vmul.f32 %v192, %v195
        %vm197 = vcmask 261120
        %198 = vst.msk [vmem:[#allocation2] sm:$0xff] %vm197, %v191
        %v199 = vld [vmem:[%s178] sm:$0xff]
        %s200 = smul.u32 %s21, 32
        %v201 = vstv %s200
        %v202 = vsub.s32 %v199, %v201
        %203 = vset.pattern.permute.xlu0 0
        %204 = vperm.xlu0 %203, %v202
        %v205 = vpop.permute.xlu0 %204
        %v206 = vld [vmem:[#allocation4] sm:$0xff]
        %v207 = vld [vmem:[%s174] sm:$0xff]
        %v208 = vsub.f32 %v207, %v191
        %v209 = vmul.f32 %v208, 1.442695
        %v210 = vpow.pop %v209
        %v211 = vadd.f32 %v196, %v210
        %vm212 = vcmp.eq.s32.totalorder %v188, %v205
        %v213 = vsel %vm212, %v207, %v206
        %214 = vst.msk [vmem:[#allocation3] sm:$0xff] %vm197, %v211
        %215 = vst.msk [vmem:[#allocation4] sm:$0xff] %vm197, %v213
        // Predicated region
        $region33: #{tpu_custom_call.1} parent=27 // pred_check
          %p216 = pneg %p179
        $region34: #{tpu_custom_call.1} parent=27 // pred_check_branch
          %218 = sbr.rel (%p216) target = $region36
        $region35: #{tpu_custom_call.1} parent=27 // pred_region
          %v219 = vld [vmem:[#allocation2] sm:$0xff]
          %v220 = vsel %vm197, %v219, -inf
          %221 = vmax.xlane.f32.xlu0 %v220
          %v222 = vpop.xlane.xlu0 %221
          %v223 = vld [vmem:[#allocation3] sm:$0xff]
          %v224 = vsub.f32 %v219, %v222
          %v225 = vmul.f32 %v224, 1.442695
          %v226 = vpow.pop %v225
          %v227 = vmul.f32 %v223, %v226
          %v228 = vsel %vm197, %v227, 0.0
          %229 = vadd.xlane.f32.xlu0 %v228
          %v230 = vpop.xlane.xlu0 %229
          %v231 = vld [vmem:[#allocation4] sm:$0xff]
          %v232 = vsel %vm197, %v231, 0.0
          %233 = vadd.xlane.f32.xlu0 %v232
          %v234 = vpop.xlane.xlu0 %233
          %v235 = vlog2.pop %v230
          %v236 = vmul.f32 %v235, 0.6931472
          %v237 = vadd.f32 %v222, %v236
          %v238 = vsub.f32 %v237, %v234
          %vm239 = vcmask 7168
          %v240 = vsel %vm239, %v238, 0.0
          %241 = vadd.xlane.f32.xlu0 %v240
          %v242 = vpop.xlane.xlu0 %241
          %v243 = vrot.slane %v242, 4
          %v244 = vadd.f32 %v242, %v243
          %v245 = vrot.slane %v244, 2
          %v246 = vadd.f32 %v244, %v245
          %v247 = vrot.slane %v246, 1
          %v248 = vadd.f32 %v246, %v247
          %s249 = vtos %v248
          %v250 = vstv %s249
          %251 = vst [vmem:[%s167] sm:$0xff] %v250
        $region36: #{tpu_custom_call.1} parent=27 // pred_fallthru
          _
        %s252 = sand.u32 %s90, 1
        %s253 = scalar_lea.sflag [#allocation6], %s252
        %s254 = sand.u32 %s90, 1
        %s255 = smul.addr %s254, 8
        %s256 = scalar_lea.vmem [#allocation5], %s255
        // Predicated region
        $region37: #{tpu_custom_call.1} parent=27 // pred_check
          %p257 = pneg %p100
        $region38: #{tpu_custom_call.1} parent=27 // pred_check_branch
          %259 = sbr.rel (%p257) target = $region40
        $region39: #{tpu_custom_call.1} parent=27 // pred_region
          %261 = vsyncadd %s253, 0
          %s262 = smul.addr %s20, 8
          %s263 = scalar_lea.hbm %s2, %s262
          %s265 = sshll.u32 %s256, 4
          %s266 = int_to_ptr.vmem [resolvable:$true] %s265
          %s267 = sshll.u32 %s263, 4
          %s268 = int_to_ptr.hbm [resolvable:$true] %s267
          %270 = dma.vmem_to_hbm [thread:$0]  %s266, 128, %s268, %s253
        $region40: #{tpu_custom_call.1} parent=27 // pred_fallthru
          _
      $region28: #{tpu_custom_call.1} parent=5 // pred_fallthru
        _
      %p271 = scmp.le.s32.totalorder 2, %s11
      // Predicated region
      $region41: #{tpu_custom_call.1} parent=5 // pred_check
        %p272 = pneg %p271
      $region42: #{tpu_custom_call.1} parent=5 // pred_check_branch
        %274 = sbr.rel (%p272) target = $region44
      $region43: #{tpu_custom_call.1} parent=5 // pred_region
        %s275 = ssub.s32 %s11, 2
        // Predicated region
        $region45: #{tpu_custom_call.1} parent=43 // pred_check
          %p276 = pneg %p106
        $region46: #{tpu_custom_call.1} parent=43 // pred_check_branch
          %278 = sbr.rel (%p276) target = $region48
        $region47: #{tpu_custom_call.1} parent=43 // pred_region
          %s279 = sand.u32 %s91, 1
          %s280 = scalar_lea.sflag [#allocation6], %s279
          %s281 = sand.u32 %s91, 1
          %s282 = smul.addr %s281, 8
          %s283 = scalar_lea.vmem [#allocation5], %s282
          %285 = dma.done %s280, 128
        $region48: #{tpu_custom_call.1} parent=43 // pred_fallthru
          _
      $region44: #{tpu_custom_call.1} parent=5 // pred_fallthru
        _
    $region6: #{tpu_custom_call.1} parent=1 // loop_footer
      %s15 = sadd.s32 1, %s11
    $region7: #{tpu_custom_call.1} parent=1 // loop_footer_branch
      %10 = sbr.rel target = $region3
    $region8: #{tpu_custom_call.1} parent=1 // loop_exit
      _
    %286 = vsyncpa [#allocation6], 1
    %s287 = scalar_lea.sflag [#allocation6], 1
    %288 = vsyncpa %s287, 1

</llo_original>
